<compile_context>
chip_gen: v5e
topology: v5e:2x2
jax: 0.10.0
libtpu: 0.0.40
codegen_flags: <defaults>
</compile_context>

<pallas_src>
import functools

import jax
import jax.numpy as jnp
from jax import lax
from jax.experimental import pallas as pl
from jax.experimental.pallas import tpu as pltpu


def _cdiv(a, b):
    return (a + b - 1) // b


def _round_up(x, m):
    return ((x + m - 1) // m) * m


def _as_float(a):
    return a if jnp.issubdtype(a.dtype, jnp.floating) else a.astype(jnp.float32)


def _sublane_gran(*arrays):
    """Row-block granularity covering the sublane packing of every dtype."""
    g = 8
    for a in arrays:
        g = max(g, 32 // max(jnp.dtype(a.dtype).itemsize, 1))
    return g


def _detect_num_tensorcores():
    """Best-effort TensorCore count: 2 only on megacore parts (v7x), else 1."""
    try:
        info = pltpu.get_tpu_info()
    except Exception:
        return 1
    for name in ("num_tensorcores", "tensorcore_count", "num_cores",
                 "core_count", "cores_per_chip", "num_cores_per_chip"):
        v = getattr(info, name, None)
        try:
            v = int(v)
        except (TypeError, ValueError):
            continue
        if v >= 1:
            return min(v, 2)
    return 1


def _to_rows128(flat, rows):
    """(n,) -> (rows, 128); zero-pads the tail (a copy only when misaligned)."""
    n = flat.shape[0]
    total = rows * 128
    if total != n:
        flat = jnp.pad(flat, (0, total - n))
    return flat.reshape(rows, 128)


def _accumulate(active, tile_idx, tile_rows, x_ref, t_ref, pw_m1, n_valid, acc_ref):
    """Add this tile's BCE-with-logits loss sums into the (8, 128) accumulator.

    Fully-valid tiles take the unmasked fast path; only the single tile that
    straddles `n_valid` pays for the iota/compare/where mask; tiles entirely
    past the data are skipped (their block was clamp-fetched but never read).
    """
    start = tile_idx * (tile_rows * 128)
    end = start + tile_rows * 128

    def tile_loss():
        x = x_ref[...].astype(jnp.float32)
        t = t_ref[...].astype(jnp.float32)
        nx = -x
        # Stable softplus(-x) = max(-x, 0) + log1p(exp(-|x|)); min(-x, x) == -|x|.
        sp = jnp.maximum(nx, 0.0) + jnp.log1p(jnp.exp(jnp.minimum(nx, x)))
        # PyTorch BCEWithLogitsLoss: (1 - t) * x + (1 + (pw - 1) * t) * softplus(-x)
        return (1.0 - t) * x + (1.0 + pw_m1 * t) * sp

    def add(l):
        # Vreg-aligned partial reduction (pure VPU adds), then one add into acc.
        acc_ref[...] += l.reshape(tile_rows // 8, 8, 128).sum(axis=0)

    @pl.when(jnp.logical_and(active, end <= n_valid))
    def _full():
        add(tile_loss())

    @pl.when(jnp.logical_and(active,
                             jnp.logical_and(start < n_valid, end > n_valid)))
    def _partial():
        l = tile_loss()
        pos = start + (lax.broadcasted_iota(jnp.int32, l.shape, 0) * 128
                       + lax.broadcasted_iota(jnp.int32, l.shape, 1))
        add(jnp.where(pos < n_valid, l, 0.0))


def _loss_kernel(x2_ref, t2_ref, x1_ref, t1_ref, pw_ref,
                 out2_ref, out1_ref, acc2_ref, acc1_ref, *,
                 nb_pc, nb1_pc, rows2, rows1, n2_valid, n1_valid, bce1_pw_m1):
    c = pl.program_id(0)   # core slice ("parallel")
    b = pl.program_id(1)   # batch tile ("arbitrary")

    @pl.when(b == 0)
    def _init():
        acc2_ref[...] = jnp.zeros_like(acc2_ref)
        acc1_ref[...] = jnp.zeros_like(acc1_ref)

    pw_m1 = pw_ref[...]    # (1, 128) pos_weight - 1, broadcast over sublanes

    # Feature head (output2 vs features, per-feature pos_weight).
    _accumulate(True, c * nb_pc + b, rows2, x2_ref, t2_ref, pw_m1,
                n2_valid, acc2_ref)
    # Binary head (output1 vs labels, pos_weight = 4): first nb1_pc steps only.
    _accumulate(b < nb1_pc, c * nb1_pc + b, rows1, x1_ref, t1_ref, bce1_pw_m1,
                n1_valid, acc1_ref)

    @pl.when(b == nb_pc - 1)
    def _flush():
        out2_ref[...] = acc2_ref[...][None]
        out1_ref[...] = acc1_ref[...][None]


def cls_bce_loss_forward(outputs, labels, features, pos_weight, weight,
                         reduction='mean', bce1_pos_weight=4.0,
                         block_rows=4096, num_cores=None):
    """JAX/Pallas equivalent of cls_bce_loss.forward -> (result, bce_loss, ce_loss)."""
    if reduction not in ('sum', 'mean', 'weight'):
        raise NotImplementedError(reduction)

    output1, output2 = outputs
    output1 = jnp.squeeze(output1)
    if output1.ndim < 1:
        output1 = output1[None]
    output2 = jnp.atleast_2d(output2)                                  # (B, F)
    features = jnp.broadcast_to(jnp.atleast_2d(jnp.squeeze(features)),
                                output2.shape)                         # (B, F)

    B, F = output2.shape
    pos_weight = jnp.asarray(pos_weight, jnp.float32).reshape(F)
    weight = jnp.asarray(weight, jnp.float32).reshape(F)

    # Lane<->feature mapping needs Fp | 128; pad feature columns up otherwise.
    if 128 % F == 0:
        Fp = F
    elif F < 128:
        Fp = 1 << (F - 1).bit_length()      # next power of two (divides 128)
    else:
        # TODO(synk): F > 128 needs a segmented per-lane accumulator; not implemented.
        raise NotImplementedError("cls_bce_loss Pallas kernel supports F <= 128")

    x2 = _as_float(output2)
    t2 = _as_float(features)
    if Fp != F:  # one copy pass, only for "odd" feature counts
        x2 = jnp.pad(x2, ((0, 0), (0, Fp - F)))
        t2 = jnp.pad(t2, ((0, 0), (0, Fp - F)))
    pw_m1 = jnp.pad(pos_weight - 1.0, (0, Fp - F))
    pw_lane = jnp.tile(pw_m1, 128 // Fp).reshape(1, 128)

    x1 = _as_float(output1).reshape(-1)
    t1 = _as_float(labels).reshape(-1)

    # Fully dense (rows, 128) slabs (reshape is free when already 128-aligned).
    n2, n1 = B * Fp, B
    rows_2, rows_1 = _cdiv(n2, 128), _cdiv(n1, 128)
    x2s = _to_rows128(x2.reshape(-1), rows_2)
    t2s = _to_rows128(t2.reshape(-1), rows_2)
    x1s = _to_rows128(x1, rows_1)
    t1s = _to_rows128(t1, rows_1)

    gran = _sublane_gran(x2s, t2s, x1s, t1s)

    C = max(1, int(num_cores)) if num_cores else _detect_num_tensorcores()

    rows2_pc = _cdiv(rows_2, C)
    blk2 = min(_round_up(block_rows, gran), _round_up(rows2_pc, gran))
    nb_pc = _cdiv(rows2_pc, blk2)            # grid steps per core
    nb2_arr = _cdiv(rows_2, blk2)            # feature blocks that exist

    rows1_pc = _cdiv(rows_1, C)
    blk1 = min(blk2, _round_up(rows1_pc, gran))
    nb1_pc = _cdiv(rows1_pc, blk1)           # per-core binary steps (<= nb_pc)
    nb1_arr = _cdiv(rows_1, blk1)

    kernel = functools.partial(
        _loss_kernel, nb_pc=nb_pc, nb1_pc=nb1_pc, rows2=blk2, rows1=blk1,
        n2_valid=n2, n1_valid=n1, bce1_pw_m1=float(bce1_pos_weight) - 1.0)

    isz = lambda a: jnp.dtype(a.dtype).itemsize
    blk_bytes = (blk2 * 128 * (isz(x2s) + isz(t2s))
                 + blk1 * 128 * (isz(x1s) + isz(t1s)))
    total_elems = (rows_2 + rows_1) * 128
    cost = pl.CostEstimate(
        flops=10 * total_elems,
        transcendentals=2 * total_elems,
        bytes_accessed=int(x2s.size * isz(x2s) + t2s.size * isz(t2s)
                           + x1s.size * isz(x1s) + t1s.size * isz(t1s)))

    part2, part1 = pl.pallas_call(
        kernel,
        out_shape=(jax.ShapeDtypeStruct((C, 8, 128), jnp.float32),
                   jax.ShapeDtypeStruct((C, 8, 128), jnp.float32)),
        grid_spec=pltpu.PrefetchScalarGridSpec(
            num_scalar_prefetch=0,
            grid=(C, nb_pc),
            in_specs=[
                pl.BlockSpec((blk2, 128),
                             lambda c, b: (jnp.minimum(c * nb_pc + b, nb2_arr - 1), 0)),
                pl.BlockSpec((blk2, 128),
                             lambda c, b: (jnp.minimum(c * nb_pc + b, nb2_arr - 1), 0)),
                pl.BlockSpec((blk1, 128),
                             lambda c, b: (jnp.minimum(
                                 c * nb1_pc + jnp.minimum(b, nb1_pc - 1),
                                 nb1_arr - 1), 0)),
                pl.BlockSpec((blk1, 128),
                             lambda c, b: (jnp.minimum(
                                 c * nb1_pc + jnp.minimum(b, nb1_pc - 1),
                                 nb1_arr - 1), 0)),
                pl.BlockSpec((1, 128), lambda c, b: (0, 0)),
            ],
            out_specs=(
                pl.BlockSpec((1, 8, 128), lambda c, b: (c, 0, 0)),
                pl.BlockSpec((1, 8, 128), lambda c, b: (c, 0, 0)),
            ),
            scratch_shapes=[pltpu.VMEM((8, 128), jnp.float32),
                            pltpu.VMEM((8, 128), jnp.float32)],
        ),
        compiler_params=pltpu.CompilerParams(
            dimension_semantics=("parallel", "arbitrary"),
            vmem_limit_bytes=int(min(48 * 1024 * 1024,
                                     max(2 * blk_bytes + (8 << 20), 16 << 20)))),
        cost_estimate=cost,
    )(x2s, t2s, x1s, t1s, pw_lane)

    # Tiny scalar epilogue: unscramble per-lane sums -> per-feature means.
    feat_sums = jnp.sum(part2, axis=0).reshape(8, 128 // Fp, Fp).sum(axis=(0, 1))[:F]
    bce_loss = jnp.sum(part1) / B
    inv_w = 1.0 / weight
    final_ce_loss = jnp.sum((feat_sums / B) * inv_w) / jnp.sum(inv_w)

    if reduction == 'sum':
        result = bce_loss + final_ce_loss
    elif reduction == 'mean':
        result = (bce_loss + final_ce_loss) * 0.5
    else:  # 'weight'
        result = 0.4 * bce_loss + 0.6 * final_ce_loss
    return result, bce_loss, final_ce_loss


def _reference(outputs, labels, features, pos_weight, weight, reduction='mean'):
    # Pure-JAX reference mirroring the PyTorch module, for sanity checking.
    x1 = jnp.squeeze(outputs[0]).astype(jnp.float32)
    if x1.ndim < 1:
        x1 = x1[None]
    y1 = labels.astype(jnp.float32).reshape(-1)
    l1 = (1.0 - y1) * x1 + (1.0 + 3.0 * y1) * jax.nn.softplus(-x1)
    bce = jnp.mean(l1)

    x2 = jnp.atleast_2d(outputs[1]).astype(jnp.float32)
    t2 = jnp.broadcast_to(jnp.atleast_2d(jnp.squeeze(features)),
                          x2.shape).astype(jnp.float32)
    pw = jnp.asarray(pos_weight, jnp.float32)
    l2 = (1.0 - t2) * x2 + (1.0 + (pw - 1.0) * t2) * jax.nn.softplus(-x2)
    invw = 1.0 / jnp.asarray(weight, jnp.float32)
    ce = jnp.sum(jnp.mean(l2, axis=0) * invw) / jnp.sum(invw)

    if reduction == 'mean':
        res = (bce + ce) / 2.0
    elif reduction == 'sum':
        res = bce + ce
    else:
        res = 0.4 * bce + 0.6 * ce
    return res, bce, ce


if __name__ == "__main__":
    key = jax.random.PRNGKey(0)
    k1, k2, k3, k4 = jax.random.split(key, 4)

    # Uneven batch exercises the partial-tile masking and padding-free layout.
    B, F = 300, 4
    pos_weight = jnp.array([2.0, 1.5, 3.0, 0.5], jnp.float32)
    weight = jnp.array([1.0, 2.0, 0.5, 4.0], jnp.float32)
    output1 = jax.random.normal(k1, (B, 1), jnp.float32)             # binary head
    output2 = jax.random.normal(k2, (B, F), jnp.float32)             # feature head
    labels = (jax.random.uniform(k3, (B,)) > 0.5).astype(jnp.float32)
    features = (jax.random.uniform(k4, (B, F)) > 0.5).astype(jnp.float32)

    for red in ('mean', 'sum', 'weight'):
        got = cls_bce_loss_forward((output1, output2), labels, features,
                                   pos_weight, weight, reduction=red)
        jax.block_until_ready(got)
        want = _reference((output1, output2), labels, features,
                          pos_weight, weight, reduction=red)
        for g, w in zip(got, want):
            assert jnp.allclose(g, w, atol=1e-5, rtol=1e-5), (red, got, want)

    # Multi-tile + forced 2-way core split (runs serially on 1-TC chips).
    got = cls_bce_loss_forward((output1, output2), labels, features,
                               pos_weight, weight, reduction='mean',
                               block_rows=8, num_cores=2)
    jax.block_until_ready(got)
    want = _reference((output1, output2), labels, features,
                      pos_weight, weight, reduction='mean')
    for g, w in zip(got, want):
        assert jnp.allclose(g, w, atol=1e-5, rtol=1e-5), ('tiled', got, want)

    # Feature count that does not divide 128 (column-padded fast path).
    B2, F2 = 257, 5
    kk = jax.random.split(jax.random.PRNGKey(1), 4)
    pw2 = jnp.linspace(0.5, 2.5, F2).astype(jnp.float32)
    w2 = jnp.linspace(1.0, 3.0, F2).astype(jnp.float32)
    o1 = jax.random.normal(kk[0], (B2, 1), jnp.float32)
    o2 = jax.random.normal(kk[1], (B2, F2), jnp.float32)
    lb = (jax.random.uniform(kk[2], (B2,)) > 0.5).astype(jnp.float32)
    ft = (jax.random.uniform(kk[3], (B2, F2)) > 0.5).astype(jnp.float32)
    got = cls_bce_loss_forward((o1, o2), lb, ft, pw2, w2, reduction='weight')
    jax.block_until_ready(got)
    want = _reference((o1, o2), lb, ft, pw2, w2, reduction='weight')
    for g, w in zip(got, want):
        assert jnp.allclose(g, w, atol=1e-5, rtol=1e-5), ('F=5', got, want)

    print("KERNEL_OK")
</pallas_src>

<mosaic_0001>
module attributes {stable_mosaic.version = 11 : i64} {
  func.func @_loss_kernel(%arg0: i32, %arg1: i32, %arg2: memref<16x128xf32, #tpu.memory_space<vmem>>, %arg3: memref<16x128xf32, #tpu.memory_space<vmem>>, %arg4: memref<8x128xf32, #tpu.memory_space<vmem>>, %arg5: memref<8x128xf32, #tpu.memory_space<vmem>>, %arg6: memref<1x128xf32, #tpu.memory_space<vmem>>, %arg7: memref<1x8x128xf32, #tpu.memory_space<vmem>>, %arg8: memref<1x8x128xf32, #tpu.memory_space<vmem>>, %arg9: memref<8x128xf32, #tpu.memory_space<vmem>>, %arg10: memref<8x128xf32, #tpu.memory_space<vmem>>) attributes {dimension_semantics = [#tpu.dimension_semantics<parallel>, #tpu.dimension_semantics<arbitrary>], iteration_bounds = array<i64: 1, 1>, scalar_prefetch = 0 : i64, scratch_operands = 2 : i64, tpu.core_type = #tpu.core_type<tc>, window_params = [{transform_indices = @transform_0, window_bounds = array<i64: 16, 128>}, {transform_indices = @transform_1, window_bounds = array<i64: 16, 128>}, {transform_indices = @transform_2, window_bounds = array<i64: 8, 128>}, {transform_indices = @transform_3, window_bounds = array<i64: 8, 128>}, {pipeline_mode = #tpu.pipeline_mode<synchronous>, transform_indices = @transform_4, window_bounds = array<i64: 1, 128>}, {transform_indices = @transform_5, window_bounds = array<i64: 1, 8, 128>}, {transform_indices = @transform_6, window_bounds = array<i64: 1, 8, 128>}]} {
    %c0_i32 = arith.constant 0 : i32
    %0 = arith.cmpi eq, %arg1, %c0_i32 : i32
    %1 = arith.extui %0 : i1 to i32
    %c0_i32_0 = arith.constant 0 : i32
    %2 = arith.cmpi ne, %1, %c0_i32_0 : i32
    scf.if %2 {
      %cst = arith.constant 0.000000e+00 : f32
      %36 = vector.broadcast %cst : f32 to vector<8x128xf32>
      %c0_17 = arith.constant 0 : index
      %c0_18 = arith.constant 0 : index
      %37 = vector.load %arg9[%c0_17, %c0_18] : memref<8x128xf32, #tpu.memory_space<vmem>>, vector<8x128xf32>
      tpu.vector_store %arg9[%c0_17, %c0_18], %36 {strides = array<i32>} : memref<8x128xf32, #tpu.memory_space<vmem>>, vector<8x128xf32>,
      %cst_19 = arith.constant 0.000000e+00 : f32
      %38 = vector.broadcast %cst_19 : f32 to vector<8x128xf32>
      %c0_20 = arith.constant 0 : index
      %c0_21 = arith.constant 0 : index
      %39 = vector.load %arg10[%c0_20, %c0_21] : memref<8x128xf32, #tpu.memory_space<vmem>>, vector<8x128xf32>
      tpu.vector_store %arg10[%c0_20, %c0_21], %38 {strides = array<i32>} : memref<8x128xf32, #tpu.memory_space<vmem>>, vector<8x128xf32>,
    } else {
    }
    %c0 = arith.constant 0 : index
    %c0_1 = arith.constant 0 : index
    %3 = vector.load %arg6[%c0, %c0_1] : memref<1x128xf32, #tpu.memory_space<vmem>>, vector<1x128xf32>
    %c1_i32 = arith.constant 1 : i32
    %4 = arith.muli %arg0, %c1_i32 : i32
    %5 = arith.addi %4, %arg1 : i32
    %c2048_i32 = arith.constant 2048 : i32
    %6 = arith.muli %5, %c2048_i32 : i32
    %c2048_i32_2 = arith.constant 2048 : i32
    %7 = arith.addi %6, %c2048_i32_2 : i32
    %c1200_i32 = arith.constant 1200 : i32
    %8 = arith.cmpi sle, %7, %c1200_i32 : i32
    %true = arith.constant true
    %9 = arith.andi %true, %8 : i1
    %10 = arith.extui %9 : i1 to i32
    %c0_i32_3 = arith.constant 0 : i32
    %11 = arith.cmpi ne, %10, %c0_i32_3 : i32
    scf.if %11 {
      %c0_17 = arith.constant 0 : index
      %c0_18 = arith.constant 0 : index
      %36 = vector.load %arg2[%c0_17, %c0_18] : memref<16x128xf32, #tpu.memory_space<vmem>>, vector<16x128xf32>
      %c0_19 = arith.constant 0 : index
      %c0_20 = arith.constant 0 : index
      %37 = vector.load %arg3[%c0_19, %c0_20] : memref<16x128xf32, #tpu.memory_space<vmem>>, vector<16x128xf32>
      %cst = arith.constant 0.000000e+00 : f32
      %38 = vector.broadcast %cst : f32 to vector<16x128xf32>
      %39 = arith.subf %38, %36 : vector<16x128xf32>
      %cst_21 = arith.constant 0.000000e+00 : f32
      %40 = vector.broadcast %cst_21 : f32 to vector<16x128xf32>
      %41 = arith.maximumf %39, %40 : vector<16x128xf32>
      %42 = arith.minimumf %39, %36 : vector<16x128xf32>
      %43 = math.exp %42 : vector<16x128xf32>
      %44 = math.log1p %43 : vector<16x128xf32>
      %45 = arith.addf %41, %44 : vector<16x128xf32>
      %cst_22 = arith.constant 1.000000e+00 : f32
      %46 = vector.broadcast %cst_22 : f32 to vector<16x128xf32>
      %47 = arith.subf %46, %37 : vector<16x128xf32>
      %48 = arith.mulf %47, %36 : vector<16x128xf32>
      %49 = vector.broadcast %3 : vector<1x128xf32> to vector<16x128xf32>
      %50 = arith.mulf %49, %37 : vector<16x128xf32>
      %cst_23 = arith.constant 1.000000e+00 : f32
      %51 = vector.broadcast %cst_23 : f32 to vector<16x128xf32>
      %52 = arith.addf %51, %50 : vector<16x128xf32>
      %53 = arith.mulf %52, %45 : vector<16x128xf32>
      %54 = arith.addf %48, %53 : vector<16x128xf32>
      %c0_24 = arith.constant 0 : index
      %c0_25 = arith.constant 0 : index
      %55 = vector.load %arg9[%c0_24, %c0_25] : memref<8x128xf32, #tpu.memory_space<vmem>>, vector<8x128xf32>
      %56 = vector.shape_cast %54 : vector<16x128xf32> to vector<2x8x128xf32>
      %cst_26 = arith.constant dense<0.000000e+00> : vector<8x128xf32>
      %57 = vector.multi_reduction <add>, %56, %cst_26 [0] : vector<2x8x128xf32> to vector<8x128xf32>
      %58 = arith.addf %55, %57 : vector<8x128xf32>
      %c0_27 = arith.constant 0 : index
      %c0_28 = arith.constant 0 : index
      %59 = vector.load %arg9[%c0_27, %c0_28] : memref<8x128xf32, #tpu.memory_space<vmem>>, vector<8x128xf32>
      tpu.vector_store %arg9[%c0_27, %c0_28], %58 {strides = array<i32>} : memref<8x128xf32, #tpu.memory_space<vmem>>, vector<8x128xf32>,
    } else {
    }
    %c1200_i32_4 = arith.constant 1200 : i32
    %12 = arith.cmpi slt, %6, %c1200_i32_4 : i32
    %c1200_i32_5 = arith.constant 1200 : i32
    %13 = arith.cmpi sgt, %7, %c1200_i32_5 : i32
    %14 = arith.andi %12, %13 : i1
    %true_6 = arith.constant true
    %15 = arith.andi %true_6, %14 : i1
    %16 = arith.extui %15 : i1 to i32
    %c0_i32_7 = arith.constant 0 : i32
    %17 = arith.cmpi ne, %16, %c0_i32_7 : i32
    scf.if %17 {
      %c0_17 = arith.constant 0 : index
      %c0_18 = arith.constant 0 : index
      %36 = vector.load %arg2[%c0_17, %c0_18] : memref<16x128xf32, #tpu.memory_space<vmem>>, vector<16x128xf32>
      %c0_19 = arith.constant 0 : index
      %c0_20 = arith.constant 0 : index
      %37 = vector.load %arg3[%c0_19, %c0_20] : memref<16x128xf32, #tpu.memory_space<vmem>>, vector<16x128xf32>
      %cst = arith.constant 0.000000e+00 : f32
      %38 = vector.broadcast %cst : f32 to vector<16x128xf32>
      %39 = arith.subf %38, %36 : vector<16x128xf32>
      %cst_21 = arith.constant 0.000000e+00 : f32
      %40 = vector.broadcast %cst_21 : f32 to vector<16x128xf32>
      %41 = arith.maximumf %39, %40 : vector<16x128xf32>
      %42 = arith.minimumf %39, %36 : vector<16x128xf32>
      %43 = math.exp %42 : vector<16x128xf32>
      %44 = math.log1p %43 : vector<16x128xf32>
      %45 = arith.addf %41, %44 : vector<16x128xf32>
      %cst_22 = arith.constant 1.000000e+00 : f32
      %46 = vector.broadcast %cst_22 : f32 to vector<16x128xf32>
      %47 = arith.subf %46, %37 : vector<16x128xf32>
      %48 = arith.mulf %47, %36 : vector<16x128xf32>
      %49 = vector.broadcast %3 : vector<1x128xf32> to vector<16x128xf32>
      %50 = arith.mulf %49, %37 : vector<16x128xf32>
      %cst_23 = arith.constant 1.000000e+00 : f32
      %51 = vector.broadcast %cst_23 : f32 to vector<16x128xf32>
      %52 = arith.addf %51, %50 : vector<16x128xf32>
      %53 = arith.mulf %52, %45 : vector<16x128xf32>
      %54 = arith.addf %48, %53 : vector<16x128xf32>
      %55 = tpu.iota {dimensions = array<i32: 0>} : vector<16x128xi32>
      %c128_i32 = arith.constant 128 : i32
      %56 = vector.broadcast %c128_i32 : i32 to vector<16x128xi32>
      %57 = arith.muli %55, %56 : vector<16x128xi32>
      %58 = tpu.iota {dimensions = array<i32: 1>} : vector<16x128xi32>
      %59 = arith.addi %57, %58 : vector<16x128xi32>
      %60 = vector.broadcast %6 : i32 to vector<16x128xi32>
      %61 = arith.addi %60, %59 : vector<16x128xi32>
      %c1200_i32_24 = arith.constant 1200 : i32
      %62 = vector.broadcast %c1200_i32_24 : i32 to vector<16x128xi32>
      %63 = arith.cmpi slt, %61, %62 : vector<16x128xi32>
      %cst_25 = arith.constant 0.000000e+00 : f32
      %64 = vector.broadcast %cst_25 : f32 to vector<16x128xf32>
      %65 = arith.select %63, %54, %64 : vector<16x128xi1>, vector<16x128xf32>
      %c0_26 = arith.constant 0 : index
      %c0_27 = arith.constant 0 : index
      %66 = vector.load %arg9[%c0_26, %c0_27] : memref<8x128xf32, #tpu.memory_space<vmem>>, vector<8x128xf32>
      %67 = vector.shape_cast %65 : vector<16x128xf32> to vector<2x8x128xf32>
      %cst_28 = arith.constant dense<0.000000e+00> : vector<8x128xf32>
      %68 = vector.multi_reduction <add>, %67, %cst_28 [0] : vector<2x8x128xf32> to vector<8x128xf32>
      %69 = arith.addf %66, %68 : vector<8x128xf32>
      %c0_29 = arith.constant 0 : index
      %c0_30 = arith.constant 0 : index
      %70 = vector.load %arg9[%c0_29, %c0_30] : memref<8x128xf32, #tpu.memory_space<vmem>>, vector<8x128xf32>
      tpu.vector_store %arg9[%c0_29, %c0_30], %69 {strides = array<i32>} : memref<8x128xf32, #tpu.memory_space<vmem>>, vector<8x128xf32>,
    } else {
    }
    %c1_i32_8 = arith.constant 1 : i32
    %18 = arith.cmpi slt, %arg1, %c1_i32_8 : i32
    %c1_i32_9 = arith.constant 1 : i32
    %19 = arith.muli %arg0, %c1_i32_9 : i32
    %20 = arith.addi %19, %arg1 : i32
    %c1024_i32 = arith.constant 1024 : i32
    %21 = arith.muli %20, %c1024_i32 : i32
    %c1024_i32_10 = arith.constant 1024 : i32
    %22 = arith.addi %21, %c1024_i32_10 : i32
    %c300_i32 = arith.constant 300 : i32
    %23 = arith.cmpi sle, %22, %c300_i32 : i32
    %24 = arith.andi %18, %23 : i1
    %25 = arith.extui %24 : i1 to i32
    %c0_i32_11 = arith.constant 0 : i32
    %26 = arith.cmpi ne, %25, %c0_i32_11 : i32
    scf.if %26 {
      %c0_17 = arith.constant 0 : index
      %c0_18 = arith.constant 0 : index
      %36 = vector.load %arg4[%c0_17, %c0_18] : memref<8x128xf32, #tpu.memory_space<vmem>>, vector<8x128xf32>
      %c0_19 = arith.constant 0 : index
      %c0_20 = arith.constant 0 : index
      %37 = vector.load %arg5[%c0_19, %c0_20] : memref<8x128xf32, #tpu.memory_space<vmem>>, vector<8x128xf32>
      %cst = arith.constant 0.000000e+00 : f32
      %38 = vector.broadcast %cst : f32 to vector<8x128xf32>
      %39 = arith.subf %38, %36 : vector<8x128xf32>
      %cst_21 = arith.constant 0.000000e+00 : f32
      %40 = vector.broadcast %cst_21 : f32 to vector<8x128xf32>
      %41 = arith.maximumf %39, %40 : vector<8x128xf32>
      %42 = arith.minimumf %39, %36 : vector<8x128xf32>
      %43 = math.exp %42 : vector<8x128xf32>
      %44 = math.log1p %43 : vector<8x128xf32>
      %45 = arith.addf %41, %44 : vector<8x128xf32>
      %cst_22 = arith.constant 1.000000e+00 : f32
      %46 = vector.broadcast %cst_22 : f32 to vector<8x128xf32>
      %47 = arith.subf %46, %37 : vector<8x128xf32>
      %48 = arith.mulf %47, %36 : vector<8x128xf32>
      %cst_23 = arith.constant 3.000000e+00 : f32
      %49 = vector.broadcast %cst_23 : f32 to vector<8x128xf32>
      %50 = arith.mulf %49, %37 : vector<8x128xf32>
      %cst_24 = arith.constant 1.000000e+00 : f32
      %51 = vector.broadcast %cst_24 : f32 to vector<8x128xf32>
      %52 = arith.addf %51, %50 : vector<8x128xf32>
      %53 = arith.mulf %52, %45 : vector<8x128xf32>
      %54 = arith.addf %48, %53 : vector<8x128xf32>
      %c0_25 = arith.constant 0 : index
      %c0_26 = arith.constant 0 : index
      %55 = vector.load %arg10[%c0_25, %c0_26] : memref<8x128xf32, #tpu.memory_space<vmem>>, vector<8x128xf32>
      %56 = vector.shape_cast %54 : vector<8x128xf32> to vector<1x8x128xf32>
      %cst_27 = arith.constant dense<0.000000e+00> : vector<8x128xf32>
      %57 = vector.multi_reduction <add>, %56, %cst_27 [0] : vector<1x8x128xf32> to vector<8x128xf32>
      %58 = arith.addf %55, %57 : vector<8x128xf32>
      %c0_28 = arith.constant 0 : index
      %c0_29 = arith.constant 0 : index
      %59 = vector.load %arg10[%c0_28, %c0_29] : memref<8x128xf32, #tpu.memory_space<vmem>>, vector<8x128xf32>
      tpu.vector_store %arg10[%c0_28, %c0_29], %58 {strides = array<i32>} : memref<8x128xf32, #tpu.memory_space<vmem>>, vector<8x128xf32>,
    } else {
    }
    %c300_i32_12 = arith.constant 300 : i32
    %27 = arith.cmpi slt, %21, %c300_i32_12 : i32
    %c300_i32_13 = arith.constant 300 : i32
    %28 = arith.cmpi sgt, %22, %c300_i32_13 : i32
    %29 = arith.andi %27, %28 : i1
    %30 = arith.andi %18, %29 : i1
    %31 = arith.extui %30 : i1 to i32
    %c0_i32_14 = arith.constant 0 : i32
    %32 = arith.cmpi ne, %31, %c0_i32_14 : i32
    scf.if %32 {
      %c0_17 = arith.constant 0 : index
      %c0_18 = arith.constant 0 : index
      %36 = vector.load %arg4[%c0_17, %c0_18] : memref<8x128xf32, #tpu.memory_space<vmem>>, vector<8x128xf32>
      %c0_19 = arith.constant 0 : index
      %c0_20 = arith.constant 0 : index
      %37 = vector.load %arg5[%c0_19, %c0_20] : memref<8x128xf32, #tpu.memory_space<vmem>>, vector<8x128xf32>
      %cst = arith.constant 0.000000e+00 : f32
      %38 = vector.broadcast %cst : f32 to vector<8x128xf32>
      %39 = arith.subf %38, %36 : vector<8x128xf32>
      %cst_21 = arith.constant 0.000000e+00 : f32
      %40 = vector.broadcast %cst_21 : f32 to vector<8x128xf32>
      %41 = arith.maximumf %39, %40 : vector<8x128xf32>
      %42 = arith.minimumf %39, %36 : vector<8x128xf32>
      %43 = math.exp %42 : vector<8x128xf32>
      %44 = math.log1p %43 : vector<8x128xf32>
      %45 = arith.addf %41, %44 : vector<8x128xf32>
      %cst_22 = arith.constant 1.000000e+00 : f32
      %46 = vector.broadcast %cst_22 : f32 to vector<8x128xf32>
      %47 = arith.subf %46, %37 : vector<8x128xf32>
      %48 = arith.mulf %47, %36 : vector<8x128xf32>
      %cst_23 = arith.constant 3.000000e+00 : f32
      %49 = vector.broadcast %cst_23 : f32 to vector<8x128xf32>
      %50 = arith.mulf %49, %37 : vector<8x128xf32>
      %cst_24 = arith.constant 1.000000e+00 : f32
      %51 = vector.broadcast %cst_24 : f32 to vector<8x128xf32>
      %52 = arith.addf %51, %50 : vector<8x128xf32>
      %53 = arith.mulf %52, %45 : vector<8x128xf32>
      %54 = arith.addf %48, %53 : vector<8x128xf32>
      %55 = tpu.iota {dimensions = array<i32: 0>} : vector<8x128xi32>
      %c128_i32 = arith.constant 128 : i32
      %56 = vector.broadcast %c128_i32 : i32 to vector<8x128xi32>
      %57 = arith.muli %55, %56 : vector<8x128xi32>
      %58 = tpu.iota {dimensions = array<i32: 1>} : vector<8x128xi32>
      %59 = arith.addi %57, %58 : vector<8x128xi32>
      %60 = vector.broadcast %21 : i32 to vector<8x128xi32>
      %61 = arith.addi %60, %59 : vector<8x128xi32>
      %c300_i32_25 = arith.constant 300 : i32
      %62 = vector.broadcast %c300_i32_25 : i32 to vector<8x128xi32>
      %63 = arith.cmpi slt, %61, %62 : vector<8x128xi32>
      %cst_26 = arith.constant 0.000000e+00 : f32
      %64 = vector.broadcast %cst_26 : f32 to vector<8x128xf32>
      %65 = arith.select %63, %54, %64 : vector<8x128xi1>, vector<8x128xf32>
      %c0_27 = arith.constant 0 : index
      %c0_28 = arith.constant 0 : index
      %66 = vector.load %arg10[%c0_27, %c0_28] : memref<8x128xf32, #tpu.memory_space<vmem>>, vector<8x128xf32>
      %67 = vector.shape_cast %65 : vector<8x128xf32> to vector<1x8x128xf32>
      %cst_29 = arith.constant dense<0.000000e+00> : vector<8x128xf32>
      %68 = vector.multi_reduction <add>, %67, %cst_29 [0] : vector<1x8x128xf32> to vector<8x128xf32>
      %69 = arith.addf %66, %68 : vector<8x128xf32>
      %c0_30 = arith.constant 0 : index
      %c0_31 = arith.constant 0 : index
      %70 = vector.load %arg10[%c0_30, %c0_31] : memref<8x128xf32, #tpu.memory_space<vmem>>, vector<8x128xf32>
      tpu.vector_store %arg10[%c0_30, %c0_31], %69 {strides = array<i32>} : memref<8x128xf32, #tpu.memory_space<vmem>>, vector<8x128xf32>,
    } else {
    }
    %c0_i32_15 = arith.constant 0 : i32
    %33 = arith.cmpi eq, %arg1, %c0_i32_15 : i32
    %34 = arith.extui %33 : i1 to i32
    %c0_i32_16 = arith.constant 0 : i32
    %35 = arith.cmpi ne, %34, %c0_i32_16 : i32
    scf.if %35 {
      %c0_17 = arith.constant 0 : index
      %c0_18 = arith.constant 0 : index
      %36 = vector.load %arg9[%c0_17, %c0_18] : memref<8x128xf32, #tpu.memory_space<vmem>>, vector<8x128xf32>
      %37 = vector.shape_cast %36 : vector<8x128xf32> to vector<1x8x128xf32>
      %c0_19 = arith.constant 0 : index
      %c0_20 = arith.constant 0 : index
      %c0_21 = arith.constant 0 : index
      %38 = vector.load %arg7[%c0_19, %c0_20, %c0_21] : memref<1x8x128xf32, #tpu.memory_space<vmem>>, vector<1x8x128xf32>
      tpu.vector_store %arg7[%c0_19, %c0_20, %c0_21], %37 {strides = array<i32>} : memref<1x8x128xf32, #tpu.memory_space<vmem>>, vector<1x8x128xf32>,
      %c0_22 = arith.constant 0 : index
      %c0_23 = arith.constant 0 : index
      %39 = vector.load %arg10[%c0_22, %c0_23] : memref<8x128xf32, #tpu.memory_space<vmem>>, vector<8x128xf32>
      %40 = vector.shape_cast %39 : vector<8x128xf32> to vector<1x8x128xf32>
      %c0_24 = arith.constant 0 : index
      %c0_25 = arith.constant 0 : index
      %c0_26 = arith.constant 0 : index
      %41 = vector.load %arg8[%c0_24, %c0_25, %c0_26] : memref<1x8x128xf32, #tpu.memory_space<vmem>>, vector<1x8x128xf32>
      tpu.vector_store %arg8[%c0_24, %c0_25, %c0_26], %40 {strides = array<i32>} : memref<1x8x128xf32, #tpu.memory_space<vmem>>, vector<1x8x128xf32>,
    } else {
    }
    return
  }
  func.func @transform_0(%arg0: i32, %arg1: i32) -> (i32, i32) {
    %c1_i32 = arith.constant 1 : i32
    %0 = arith.muli %arg0, %c1_i32 : i32
    %1 = arith.addi %0, %arg1 : i32
    %c0_i32 = arith.constant 0 : i32
    %2 = arith.minsi %1, %c0_i32 : i32
    %c0_i32_0 = arith.constant 0 : i32
    %c0_i32_1 = arith.constant 0 : i32
    return %2, %c0_i32_0 : i32, i32
  }
  func.func @transform_1(%arg0: i32, %arg1: i32) -> (i32, i32) {
    %c1_i32 = arith.constant 1 : i32
    %0 = arith.muli %arg0, %c1_i32 : i32
    %1 = arith.addi %0, %arg1 : i32
    %c0_i32 = arith.constant 0 : i32
    %2 = arith.minsi %1, %c0_i32 : i32
    %c0_i32_0 = arith.constant 0 : i32
    %c0_i32_1 = arith.constant 0 : i32
    return %2, %c0_i32_0 : i32, i32
  }
  func.func @transform_2(%arg0: i32, %arg1: i32) -> (i32, i32) {
    %c1_i32 = arith.constant 1 : i32
    %0 = arith.muli %arg0, %c1_i32 : i32
    %c0_i32 = arith.constant 0 : i32
    %1 = arith.minsi %arg1, %c0_i32 : i32
    %2 = arith.addi %0, %1 : i32
    %c0_i32_0 = arith.constant 0 : i32
    %3 = arith.minsi %2, %c0_i32_0 : i32
    %c0_i32_1 = arith.constant 0 : i32
    %c0_i32_2 = arith.constant 0 : i32
    return %3, %c0_i32_1 : i32, i32
  }
  func.func @transform_3(%arg0: i32, %arg1: i32) -> (i32, i32) {
    %c1_i32 = arith.constant 1 : i32
    %0 = arith.muli %arg0, %c1_i32 : i32
    %c0_i32 = arith.constant 0 : i32
    %1 = arith.minsi %arg1, %c0_i32 : i32
    %2 = arith.addi %0, %1 : i32
    %c0_i32_0 = arith.constant 0 : i32
    %3 = arith.minsi %2, %c0_i32_0 : i32
    %c0_i32_1 = arith.constant 0 : i32
    %c0_i32_2 = arith.constant 0 : i32
    return %3, %c0_i32_1 : i32, i32
  }
  func.func @transform_4(%arg0: i32, %arg1: i32) -> (i32, i32) {
    %c0_i32 = arith.constant 0 : i32
    %c0_i32_0 = arith.constant 0 : i32
    %c0_i32_1 = arith.constant 0 : i32
    return %c0_i32, %c0_i32_0 : i32, i32
  }
  func.func @transform_5(%arg0: i32, %arg1: i32) -> (i32, i32, i32) {
    %c0_i32 = arith.constant 0 : i32
    %c0_i32_0 = arith.constant 0 : i32
    %c0_i32_1 = arith.constant 0 : i32
    return %arg0, %c0_i32, %c0_i32_0 : i32, i32, i32
  }
  func.func @transform_6(%arg0: i32, %arg1: i32) -> (i32, i32, i32) {
    %c0_i32 = arith.constant 0 : i32
    %c0_i32_0 = arith.constant 0 : i32
    %c0_i32_1 = arith.constant 0 : i32
    return %arg0, %c0_i32, %c0_i32_0 : i32, i32, i32
  }
}

</mosaic_0001>

<llo_original>
// kernel: tpu_custom_call.1
$region0: #{tpu_custom_call.1}
  #allocation0 [shape = 'u32[]', space=smem, size = 0x4, offset = 0x4, fixed_abs, tag = 'smem constant byte address 0x4 - core index']
  #allocation1 [shape = 'u32[72,128]{1,0:T(1,128)}', space=vmem, size = 0x9000, scoped, tag = 'internal scratch']
  #allocation2 [shape = 'f32[8,128]{1,0:T(8,128)}', space=vmem, size = 0x1000, scoped, tag = 'scratch operand']
  #allocation3 [shape = 'f32[8,128]{1,0:T(8,128)}', space=vmem, size = 0x1000, scoped, tag = 'scratch operand']
  %s0 = inlined_call_operand.hbm [shape: f32[10,128], index: 0, kind: input, shape index: {}]
  %s1 = inlined_call_operand.hbm [shape: f32[10,128], index: 1, kind: input, shape index: {}]
  %s2 = inlined_call_operand.hbm [shape: f32[3,128], index: 2, kind: input, shape index: {}]
  %s3 = inlined_call_operand.hbm [shape: f32[3,128], index: 3, kind: input, shape index: {}]
  %s4 = inlined_call_operand.vmem [shape: f32[1,128], index: 4, kind: input, shape index: {}]
  %s5 = inlined_call_operand.hbm [shape: f32[1,8,128], index: 5, kind: output, shape index: {0}]
  %s6 = inlined_call_operand.hbm [shape: f32[1,8,128], index: 6, kind: output, shape index: {1}]
  %7 = xla_tuple %s5, %s6
  %s8 = sld [smem:[#allocation0]]
  $region78: #{tpu_custom_call.1} parent=0
    _
  %s10 = ssub.s32 1, %s8
  %s11 = scalar_select 0, %s10, %s8
  $region1: #{tpu_custom_call.1} parent=0
    #allocation4 [shape = 'u8[8192]{0}', space=vmem, size = 0x2000, scoped, tag = 'input window, operand 0, single buffered']
    #allocation5 [shape = 's32[1]{0}', space=sflag, size = 0x4, scoped, tag = 'scoped memory for tpu_custom_call.1']
    #allocation6 [shape = 's32[1]{0}', space=sflag, size = 0x4, scoped, tag = 'scoped memory for tpu_custom_call.1']
    #allocation7 [shape = 'u8[8192]{0}', space=vmem, size = 0x2000, scoped, tag = 'input window, operand 1, single buffered']
    #allocation8 [shape = 's32[1]{0}', space=sflag, size = 0x4, scoped, tag = 'scoped memory for tpu_custom_call.1']
    #allocation9 [shape = 'u8[4096]{0}', space=vmem, size = 0x1000, scoped, tag = 'input window, operand 2, single buffered']
    #allocation10 [shape = 'u8[4096]{0}', space=vmem, size = 0x1000, scoped, tag = 'input window, operand 3, single buffered']
    #allocation11 [shape = 's32[1]{0}', space=sflag, size = 0x4, scoped, tag = 'scoped memory for tpu_custom_call.1']
    #allocation12 [shape = 'u8[4096]{0}', space=vmem, size = 0x1000, scoped, tag = 'output window, operand 0, single buffered']
    #allocation13 [shape = 'u8[4096]{0}', space=vmem, size = 0x1000, scoped, tag = 'output window, operand 1, single buffered']
    #allocation14 [shape = 's32[1]{0}', space=sflag, size = 0x4, scoped, tag = 'scoped memory for tpu_custom_call.1']
    %12 = vsyncpa [#allocation5], 0
    %13 = vsyncpa [#allocation8], 0
    %14 = vsyncpa [#allocation11], 0
    %15 = vsyncpa [#allocation6], 0
    %16 = vsyncpa [#allocation14], 0
    // Predicated region
    $region2: #{tpu_custom_call.1} parent=1 // pred_check
      _
    $region3: #{tpu_custom_call.1} parent=1 // pred_check_branch
      %18 = sbr.rel (0) target = $region5
    $region4: #{tpu_custom_call.1} parent=1 // pred_region
      %s19 = sadd.s32 0, 0
      %p20 = scmp.lt.s32.totalorder %s19, 0
      %s21 = scalar_select %p20, %s19, 0
      %s22 = smul.u32 2, %s21
      %24 = vsyncadd [#allocation5], 0
      %s25 = smul.addr %s22, 8
      %s26 = scalar_lea.hbm %s0, %s25
      %s27 = sshll.u32 %s26, 4
      %s28 = int_to_ptr.hbm [resolvable:$true] %s27
      %s29 = sshll.u32 [#allocation4], 4
      %s30 = int_to_ptr.vmem [resolvable:$true] %s29
      %35 = dma.hbm_to_vmem [thread:$0]  %s28, 256, %s30, [#allocation5], 128, 128, 8
    $region5: #{tpu_custom_call.1} parent=1 // pred_fallthru
      _
    // Predicated region
    $region6: #{tpu_custom_call.1} parent=1 // pred_check
      _
    $region7: #{tpu_custom_call.1} parent=1 // pred_check_branch
      %37 = sbr.rel (0) target = $region9
    $region8: #{tpu_custom_call.1} parent=1 // pred_region
      %s38 = sadd.s32 0, 0
      %p39 = scmp.lt.s32.totalorder %s38, 0
      %s40 = scalar_select %p39, %s38, 0
      %s41 = smul.u32 2, %s40
      %43 = vsyncadd [#allocation8], 0
      %s44 = smul.addr %s41, 8
      %s45 = scalar_lea.hbm %s1, %s44
      %s46 = sshll.u32 %s45, 4
      %s47 = int_to_ptr.hbm [resolvable:$true] %s46
      %s48 = sshll.u32 [#allocation7], 4
      %s49 = int_to_ptr.vmem [resolvable:$true] %s48
      %54 = dma.hbm_to_vmem [thread:$0]  %s47, 256, %s49, [#allocation8], 128, 128, 8
    $region9: #{tpu_custom_call.1} parent=1 // pred_fallthru
      _
    // Predicated region
    $region10: #{tpu_custom_call.1} parent=1 // pred_check
      _
    $region11: #{tpu_custom_call.1} parent=1 // pred_check_branch
      %56 = sbr.rel (0) target = $region13
    $region12: #{tpu_custom_call.1} parent=1 // pred_region
      %s57 = sadd.s32 0, 0
      %p58 = scmp.lt.s32.totalorder %s57, 0
      %s59 = scalar_select %p58, %s57, 0
      %s60 = smul.u32 2, %s59
      %s61 = ssub.s32 1, %s60
      %s62 = smul.u32 4, %s61
      %s63 = ssub.s32 8, %s62
      %s64 = sshll.u32 %s63, 4
      %65 = vsyncadd [#allocation8], %s64
      %p66 = scmp.ne.s32.totalorder 0, %s62
      %s67 = smul.addr %s60, 4
      %s68 = scalar_lea.hbm %s2, %s67
      %s69 = smul.u32 4, %s61
      %s70 = sshll.u32 %s68, 4
      %s71 = int_to_ptr.hbm [resolvable:$true] %s70
      %s72 = sshll.u32 [#allocation9], 4
      %s73 = int_to_ptr.vmem [resolvable:$true] %s72
      %s74 = sshll.u32 %s69, 4
      %78 = dma.hbm_to_vmem [thread:$0]  (%p66), %s71, %s74, %s73, [#allocation8], 64, 64, 4
    $region13: #{tpu_custom_call.1} parent=1 // pred_fallthru
      _
    // Predicated region
    $region14: #{tpu_custom_call.1} parent=1 // pred_check
      _
    $region15: #{tpu_custom_call.1} parent=1 // pred_check_branch
      %80 = sbr.rel (0) target = $region17
    $region16: #{tpu_custom_call.1} parent=1 // pred_region
      %s81 = sadd.s32 0, 0
      %p82 = scmp.lt.s32.totalorder %s81, 0
      %s83 = scalar_select %p82, %s81, 0
      %s84 = smul.u32 2, %s83
      %s85 = ssub.s32 1, %s84
      %s86 = smul.u32 4, %s85
      %s87 = ssub.s32 8, %s86
      %s88 = sshll.u32 %s87, 4
      %89 = vsyncadd [#allocation11], %s88
      %p90 = scmp.ne.s32.totalorder 0, %s86
      %s91 = smul.addr %s84, 4
      %s92 = scalar_lea.hbm %s3, %s91
      %s93 = smul.u32 4, %s85
      %s94 = sshll.u32 %s92, 4
      %s95 = int_to_ptr.hbm [resolvable:$true] %s94
      %s96 = sshll.u32 [#allocation10], 4
      %s97 = int_to_ptr.vmem [resolvable:$true] %s96
      %s98 = sshll.u32 %s93, 4
      %102 = dma.hbm_to_vmem [thread:$0]  (%p90), %s95, %s98, %s97, [#allocation11], 64, 64, 4
    $region17: #{tpu_custom_call.1} parent=1 // pred_fallthru
      _
    // Predicated region
    $region18: #{tpu_custom_call.1} parent=1 // pred_check
      _
    $region19: #{tpu_custom_call.1} parent=1 // pred_check_branch
      %104 = sbr.rel (0) target = $region21
    $region20: #{tpu_custom_call.1} parent=1 // pred_region
      _
    $region21: #{tpu_custom_call.1} parent=1 // pred_fallthru
      _
    // Predicated region
    $region22: #{tpu_custom_call.1} parent=1 // pred_check
      _
    $region23: #{tpu_custom_call.1} parent=1 // pred_check_branch
      %106 = sbr.rel (0) target = $region25
    $region24: #{tpu_custom_call.1} parent=1 // pred_region
      %108 = dma.done [#allocation5], 256
    $region25: #{tpu_custom_call.1} parent=1 // pred_fallthru
      _
    // Predicated region
    $region26: #{tpu_custom_call.1} parent=1 // pred_check
      _
    $region27: #{tpu_custom_call.1} parent=1 // pred_check_branch
      %110 = sbr.rel (0) target = $region29
    $region28: #{tpu_custom_call.1} parent=1 // pred_region
      %112 = dma.done [#allocation8], 256
    $region29: #{tpu_custom_call.1} parent=1 // pred_fallthru
      _
    // Predicated region
    $region30: #{tpu_custom_call.1} parent=1 // pred_check
      _
    $region31: #{tpu_custom_call.1} parent=1 // pred_check_branch
      %114 = sbr.rel (0) target = $region33
    $region32: #{tpu_custom_call.1} parent=1 // pred_region
      %116 = dma.done [#allocation8], 128
    $region33: #{tpu_custom_call.1} parent=1 // pred_fallthru
      _
    // Predicated region
    $region34: #{tpu_custom_call.1} parent=1 // pred_check
      _
    $region35: #{tpu_custom_call.1} parent=1 // pred_check_branch
      %118 = sbr.rel (0) target = $region37
    $region36: #{tpu_custom_call.1} parent=1 // pred_region
      %120 = dma.done [#allocation11], 128
    $region37: #{tpu_custom_call.1} parent=1 // pred_fallthru
      _
    %s121 = sadd.s32 0, 0
    %p122 = scmp.lt.s32.totalorder %s121, 0
    %s123 = scalar_select %p122, %s121, 0
    %s124 = smul.u32 2, %s123
    %s125 = sadd.s32 0, 0
    %p126 = scmp.lt.s32.totalorder %s125, 0
    %s127 = scalar_select %p126, %s125, 0
    %s128 = smul.u32 2, %s127
    %s129 = sadd.s32 0, 0
    %p130 = scmp.lt.s32.totalorder %s129, 0
    %s131 = scalar_select %p130, %s129, 0
    %s132 = smul.u32 2, %s131
    %s133 = ssub.s32 1, %s132
    %s134 = smul.u32 4, %s133
    %s135 = sadd.s32 0, 0
    %p136 = scmp.lt.s32.totalorder %s135, 0
    %s137 = scalar_select %p136, %s135, 0
    %s138 = smul.u32 2, %s137
    %s139 = ssub.s32 1, %s138
    %s140 = smul.u32 4, %s139
    %p141 = scmp.eq.s32.totalorder 0, 0
    // Predicated region
    $region38: #{tpu_custom_call.1} parent=1 // pred_check
      %p142 = pneg %p141
    $region39: #{tpu_custom_call.1} parent=1 // pred_check_branch
      %144 = sbr.rel (%p142) target = $region41
    $region40: #{tpu_custom_call.1} parent=1 // pred_region
      %145 = vst [vmem:[#allocation2] sm:$0xff] 0.0
      %146 = vst [vmem:[#allocation3] sm:$0xff] 0.0
    $region41: #{tpu_custom_call.1} parent=1 // pred_fallthru
      _
    %v147 = vld [vmem:[%s4] sm:$0x1]
    %s148 = sadd.s32 0, 0
    %s149 = smul.u32 %s148, 2048
    %s150 = sadd.s32 %s149, 2048
    %p151 = scmp.le.s32.totalorder %s150, 1200
    // Predicated region
    $region42: #{tpu_custom_call.1} parent=1 // pred_check
      %p152 = pneg %p151
    $region43: #{tpu_custom_call.1} parent=1 // pred_check_branch
      %154 = sbr.rel (%p152) target = $region45
    $region44: #{tpu_custom_call.1} parent=1 // pred_region
      %v155 = vld [vmem:[#allocation4] sm:$0xff]
      %v156 = vld [vmem:[#allocation4 + $0x8] sm:$0xff]
      %v157 = vld [vmem:[#allocation7] sm:$0xff]
      %v158 = vld [vmem:[#allocation7 + $0x8] sm:$0xff]
      %v159 = vsub.f32 0.0, %v155
      %v160 = vsub.f32 0.0, %v156
      %v161 = vmax.f32 %v159, 0.0
      %v162 = vmax.f32 %v160, 0.0
      %v163 = vmin.f32 %v159, %v155
      %v164 = vmin.f32 %v160, %v156
      %v165 = vmul.f32 %v163, 1.442695
      %v166 = vpow.pop %v165
      %v167 = vmul.f32 %v164, 1.442695
      %v168 = vpow.pop %v167
      %v169 = vadd.f32 %v166, 1.0
      %v170 = vlog2.pop %v169
      %v171 = vmul.f32 %v170, 0.6931472
      %v172 = vmul.f32 -0.5, %v166
      %v173 = vadd.f32 %v172, 1.0
      %v174 = vmul.f32 %v173, %v166
      %v175 = vand.u32 2147483647, %v166
      %vm176 = vcmp.lt.f32.partialorder %v175, 0.0004427343
      %v177 = vsel %vm176, %v174, %v171
      %v178 = vadd.f32 %v168, 1.0
      %v179 = vlog2.pop %v178
      %v180 = vmul.f32 %v179, 0.6931472
      %v181 = vmul.f32 -0.5, %v168
      %v182 = vadd.f32 %v181, 1.0
      %v183 = vmul.f32 %v182, %v168
      %v184 = vand.u32 2147483647, %v168
      %vm185 = vcmp.lt.f32.partialorder %v184, 0.0004427343
      %v186 = vsel %vm185, %v183, %v180
      %v187 = vadd.f32 %v161, %v177
      %v188 = vadd.f32 %v162, %v186
      %v189 = vsub.f32 1.0, %v157
      %v190 = vsub.f32 1.0, %v158
      %v191 = vmul.f32 %v189, %v155
      %v192 = vmul.f32 %v190, %v156
      %v194 = vperm.slane %v147, 0
      %v196 = vmul.f32 %v194, %v157
      %v197 = vmul.f32 %v194, %v158
      %v198 = vadd.f32 %v196, 1.0
      %v199 = vadd.f32 %v197, 1.0
      %v200 = vmul.f32 %v198, %v187
      %v201 = vmul.f32 %v199, %v188
      %v202 = vadd.f32 %v191, %v200
      %v203 = vadd.f32 %v192, %v201
      %v204 = vld [vmem:[#allocation2] sm:$0xff]
      %v205 = vadd.f32 %v202, %v203
      %v206 = vadd.f32 %v204, %v205
      %207 = vst [vmem:[#allocation2] sm:$0xff] %v206
    $region45: #{tpu_custom_call.1} parent=1 // pred_fallthru
      _
    %p208 = scmp.lt.s32.totalorder %s149, 1200
    %p209 = scmp.gt.s32.totalorder %s150, 1200
    %p210 = pnand %p208, %p209
    %p211 = pneg %p210
    // Predicated region
    $region46: #{tpu_custom_call.1} parent=1 // pred_check
      _
    $region47: #{tpu_custom_call.1} parent=1 // pred_check_branch
      %213 = sbr.rel (%p210) target = $region49
    $region48: #{tpu_custom_call.1} parent=1 // pred_region
      %v214 = vld [vmem:[#allocation4] sm:$0xff]
      %v215 = vld [vmem:[#allocation4 + $0x8] sm:$0xff]
      %v216 = vld [vmem:[#allocation7] sm:$0xff]
      %v217 = vld [vmem:[#allocation7 + $0x8] sm:$0xff]
      %v218 = vsub.f32 0.0, %v214
      %v219 = vsub.f32 0.0, %v215
      %v220 = vmax.f32 %v218, 0.0
      %v221 = vmax.f32 %v219, 0.0
      %v222 = vmin.f32 %v218, %v214
      %v223 = vmin.f32 %v219, %v215
      %v224 = vmul.f32 %v222, 1.442695
      %v225 = vpow.pop %v224
      %v226 = vmul.f32 %v223, 1.442695
      %v227 = vpow.pop %v226
      %v228 = vadd.f32 %v225, 1.0
      %v229 = vlog2.pop %v228
      %v230 = vmul.f32 %v229, 0.6931472
      %v231 = vmul.f32 -0.5, %v225
      %v232 = vadd.f32 %v231, 1.0
      %v233 = vmul.f32 %v232, %v225
      %v234 = vand.u32 2147483647, %v225
      %vm235 = vcmp.lt.f32.partialorder %v234, 0.0004427343
      %v236 = vsel %vm235, %v233, %v230
      %v237 = vadd.f32 %v227, 1.0
      %v238 = vlog2.pop %v237
      %v239 = vmul.f32 %v238, 0.6931472
      %v240 = vmul.f32 -0.5, %v227
      %v241 = vadd.f32 %v240, 1.0
      %v242 = vmul.f32 %v241, %v227
      %v243 = vand.u32 2147483647, %v227
      %vm244 = vcmp.lt.f32.partialorder %v243, 0.0004427343
      %v245 = vsel %vm244, %v242, %v239
      %v246 = vadd.f32 %v220, %v236
      %v247 = vadd.f32 %v221, %v245
      %v248 = vsub.f32 1.0, %v216
      %v249 = vsub.f32 1.0, %v217
      %v250 = vmul.f32 %v248, %v214
      %v251 = vmul.f32 %v249, %v215
      %v253 = vperm.slane %v147, 0
      %v255 = vmul.f32 %v253, %v216
      %v256 = vmul.f32 %v253, %v217
      %v257 = vadd.f32 %v255, 1.0
      %v258 = vadd.f32 %v256, 1.0
      %v259 = vmul.f32 %v257, %v246
      %v260 = vmul.f32 %v258, %v247
      %v261 = vadd.f32 %v250, %v259
      %v262 = vadd.f32 %v251, %v260
      %v263 = vlaneseq
      %v264 = vshrl.u32 %v263, 7
      %v265 = vadd.s32 %v264, 8
      %v266 = vmul.u32 %v264, 128
      %v267 = vmul.u32 %v265, 128
      %v268 = vlaneseq
      %v269 = vand.u32 %v268, 127
      %v270 = vadd.s32 %v266, %v269
      %v271 = vadd.s32 %v267, %v269
      %v272 = vstv %s149
      %v273 = vadd.s32 %v272, %v270
      %v274 = vadd.s32 %v272, %v271
      %vm275 = vcmp.lt.s32.totalorder %v273, 1200
      %vm276 = vcmp.lt.s32.totalorder %v274, 1200
      %v277 = vsel %vm275, %v261, 0.0
      %v278 = vsel %vm276, %v262, 0.0
      %v279 = vld [vmem:[#allocation2] sm:$0xff]
      %v280 = vadd.f32 %v277, %v278
      %v281 = vadd.f32 %v279, %v280
      %282 = vst [vmem:[#allocation2] sm:$0xff] %v281
    $region49: #{tpu_custom_call.1} parent=1 // pred_fallthru
      _
    %p283 = scmp.lt.s32.totalorder 0, 1
    %s284 = smul.u32 %s148, 1024
    %s285 = sadd.s32 %s284, 1024
    %p286 = scmp.le.s32.totalorder %s285, 300
    %p287 = pnand %p283, %p286
    %p288 = pneg %p287
    // Predicated region
    $region50: #{tpu_custom_call.1} parent=1 // pred_check
      _
    $region51: #{tpu_custom_call.1} parent=1 // pred_check_branch
      %290 = sbr.rel (%p287) target = $region53
    $region52: #{tpu_custom_call.1} parent=1 // pred_region
      %v291 = vld [vmem:[#allocation9] sm:$0xff]
      %v292 = vld [vmem:[#allocation10] sm:$0xff]
      %v293 = vsub.f32 0.0, %v291
      %v294 = vmax.f32 %v293, 0.0
      %v295 = vmin.f32 %v293, %v291
      %v296 = vmul.f32 %v295, 1.442695
      %v297 = vpow.pop %v296
      %v298 = vadd.f32 %v297, 1.0
      %v299 = vlog2.pop %v298
      %v300 = vmul.f32 %v299, 0.6931472
      %v301 = vmul.f32 -0.5, %v297
      %v302 = vadd.f32 %v301, 1.0
      %v303 = vmul.f32 %v302, %v297
      %v304 = vand.u32 2147483647, %v297
      %vm305 = vcmp.lt.f32.partialorder %v304, 0.0004427343
      %v306 = vsel %vm305, %v303, %v300
      %v307 = vadd.f32 %v294, %v306
      %v308 = vsub.f32 1.0, %v292
      %v309 = vmul.f32 %v308, %v291
      %v310 = vmul.f32 %v292, 3.0
      %v311 = vadd.f32 %v310, 1.0
      %v312 = vmul.f32 %v311, %v307
      %v313 = vadd.f32 %v309, %v312
      %v314 = vld [vmem:[#allocation3] sm:$0xff]
      %v315 = vadd.f32 %v313, 0.0
      %v316 = vadd.f32 %v314, %v315
      %317 = vst [vmem:[#allocation3] sm:$0xff] %v316
    $region53: #{tpu_custom_call.1} parent=1 // pred_fallthru
      _
    %p318 = scmp.lt.s32.totalorder %s284, 300
    %p319 = scmp.gt.s32.totalorder %s285, 300
    %p320 = pnand %p318, %p319
    %p321 = pneg %p320
    %p322 = pnand %p283, %p321
    %p323 = pneg %p322
    // Predicated region
    $region54: #{tpu_custom_call.1} parent=1 // pred_check
      _
    $region55: #{tpu_custom_call.1} parent=1 // pred_check_branch
      %325 = sbr.rel (%p322) target = $region57
    $region56: #{tpu_custom_call.1} parent=1 // pred_region
      %v326 = vld [vmem:[#allocation9] sm:$0xff]
      %v327 = vld [vmem:[#allocation10] sm:$0xff]
      %v328 = vsub.f32 0.0, %v326
      %v329 = vmax.f32 %v328, 0.0
      %v330 = vmin.f32 %v328, %v326
      %v331 = vmul.f32 %v330, 1.442695
      %v332 = vpow.pop %v331
      %v333 = vadd.f32 %v332, 1.0
      %v334 = vlog2.pop %v333
      %v335 = vmul.f32 %v334, 0.6931472
      %v336 = vmul.f32 -0.5, %v332
      %v337 = vadd.f32 %v336, 1.0
      %v338 = vmul.f32 %v337, %v332
      %v339 = vand.u32 2147483647, %v332
      %vm340 = vcmp.lt.f32.partialorder %v339, 0.0004427343
      %v341 = vsel %vm340, %v338, %v335
      %v342 = vadd.f32 %v329, %v341
      %v343 = vsub.f32 1.0, %v327
      %v344 = vmul.f32 %v343, %v326
      %v345 = vmul.f32 %v327, 3.0
      %v346 = vadd.f32 %v345, 1.0
      %v347 = vmul.f32 %v346, %v342
      %v348 = vadd.f32 %v344, %v347
      %v349 = vlaneseq
      %v350 = vshrl.u32 %v349, 7
      %v351 = vmul.u32 %v350, 128
      %v352 = vlaneseq
      %v353 = vand.u32 %v352, 127
      %v354 = vadd.s32 %v351, %v353
      %v355 = vstv %s284
      %v356 = vadd.s32 %v355, %v354
      %vm357 = vcmp.lt.s32.totalorder %v356, 300
      %v358 = vsel %vm357, %v348, 0.0
      %v359 = vld [vmem:[#allocation3] sm:$0xff]
      %v360 = vadd.f32 %v358, 0.0
      %v361 = vadd.f32 %v359, %v360
      %362 = vst [vmem:[#allocation3] sm:$0xff] %v361
    $region57: #{tpu_custom_call.1} parent=1 // pred_fallthru
      _
    // Predicated region
    $region58: #{tpu_custom_call.1} parent=1 // pred_check
      %p363 = pneg %p141
    $region59: #{tpu_custom_call.1} parent=1 // pred_check_branch
      %365 = sbr.rel (%p363) target = $region61
    $region60: #{tpu_custom_call.1} parent=1 // pred_region
      %v366 = vld [vmem:[#allocation2] sm:$0xff]
      %367 = vst [vmem:[#allocation12] sm:$0xff] %v366
      %v368 = vld [vmem:[#allocation3] sm:$0xff]
      %369 = vst [vmem:[#allocation13] sm:$0xff] %v368
    $region61: #{tpu_custom_call.1} parent=1 // pred_fallthru
      _
    // Predicated region
    $region62: #{tpu_custom_call.1} parent=1 // pred_check
      _
    $region63: #{tpu_custom_call.1} parent=1 // pred_check_branch
      %371 = sbr.rel (0) target = $region65
    $region64: #{tpu_custom_call.1} parent=1 // pred_region
      %373 = vsyncadd [#allocation6], 0
      %s375 = sshll.u32 [#allocation12], 4
      %s376 = int_to_ptr.vmem [resolvable:$true] %s375
      %s377 = sshll.u32 %s5, 4
      %s378 = int_to_ptr.hbm [resolvable:$true] %s377
      %380 = dma.vmem_to_hbm [thread:$0]  %s376, 128, %s378, [#allocation6]
    $region65: #{tpu_custom_call.1} parent=1 // pred_fallthru
      _
    // Predicated region
    $region66: #{tpu_custom_call.1} parent=1 // pred_check
      _
    $region67: #{tpu_custom_call.1} parent=1 // pred_check_branch
      %382 = sbr.rel (0) target = $region69
    $region68: #{tpu_custom_call.1} parent=1 // pred_region
      %384 = vsyncadd [#allocation14], 0
      %s386 = sshll.u32 [#allocation13], 4
      %s387 = int_to_ptr.vmem [resolvable:$true] %s386
      %s388 = sshll.u32 %s6, 4
      %s389 = int_to_ptr.hbm [resolvable:$true] %s388
      %391 = dma.vmem_to_hbm [thread:$0]  %s387, 128, %s389, [#allocation14]
    $region69: #{tpu_custom_call.1} parent=1 // pred_fallthru
      _
    // Predicated region
    $region70: #{tpu_custom_call.1} parent=1 // pred_check
      _
    $region71: #{tpu_custom_call.1} parent=1 // pred_check_branch
      %393 = sbr.rel (0) target = $region73
    $region72: #{tpu_custom_call.1} parent=1 // pred_region
      %395 = dma.done [#allocation6], 128
    $region73: #{tpu_custom_call.1} parent=1 // pred_fallthru
      _
    // Predicated region
    $region74: #{tpu_custom_call.1} parent=1 // pred_check
      _
    $region75: #{tpu_custom_call.1} parent=1 // pred_check_branch
      %397 = sbr.rel (0) target = $region77
    $region76: #{tpu_custom_call.1} parent=1 // pred_region
      %399 = dma.done [#allocation14], 128
    $region77: #{tpu_custom_call.1} parent=1 // pred_fallthru
      _
    %400 = vsyncpa [#allocation5], 1
    %401 = vsyncpa [#allocation8], 1
    %402 = vsyncpa [#allocation11], 1
    %403 = vsyncpa [#allocation6], 1
    %404 = vsyncpa [#allocation14], 1

</llo_original>
